<compile_context>
chip_gen: v7x
topology: tpu7x:2x2x1
jax: 0.10.0
libtpu: 0.0.40
codegen_flags: <defaults>
</compile_context>

<pallas_src>
import jax
import jax.numpy as jnp
from jax import lax
from jax.experimental import pallas as pl
from jax.experimental.pallas import tpu as pltpu


# ---------------------------------------------------------------------------
# Fused LSTM recurrence + SelfAttention + output Linear (one batch tile per grid step)
# ---------------------------------------------------------------------------
def _fused_lstm_attn_kernel(gates_ref, whh_ref, watt_ref, batt_ref, wout_ref, bout_ref,
                            len_ref, mask_ref, logit_ref, attn_ref,
                            slab, h_sc, c_sc):
    """
    gates_ref : (T, Bt, 4H) f32   precomputed x_t @ W_ih^T + (b_ih + b_hh), time-major
    whh_ref   : (H, 4H)     bf16  W_hh^T (constant across the grid)
    watt_ref  : (1, H)      f32   attention scoring vector (Linear(H, 1))
    batt_ref  : (1, 1)      f32
    wout_ref  : (H, Opad)   f32   output head weight, lane-padded to 128 cols
    bout_ref  : (1, Opad)   f32
    len_ref   : (Bt, 1)     i32
    mask_ref  : (T, Bt, 1)  f32   (t < length) validity mask
    logit_ref : (Bt, Opad)  f32   out (lane-dense)
    attn_ref  : (T, Bt, 1)  f32   out (squeezed/transposed to (B, T) in the wrapper)
    slab      : (T, Bt, H)  f32   VMEM scratch: hidden states (zero past length)
    h_sc,c_sc : (Bt, H)     f32   VMEM scratch: recurrent state
    """
    T = gates_ref.shape[0]
    H = whh_ref.shape[0]

    h_sc[...] = jnp.zeros_like(h_sc)
    c_sc[...] = jnp.zeros_like(c_sc)
    len_b1 = len_ref[...]                                   # (Bt, 1) int32

    def step(t, carry):
        h_prev = h_sc[...]
        c_prev = c_sc[...]
        # Only the truly sequential matmul stays in the loop (bf16 MXU, f32 accumulate);
        # the x-projection was hoisted into one big matmul outside the kernel.
        gates = gates_ref[t] + jnp.dot(h_prev.astype(jnp.bfloat16), whh_ref[...],
                                       preferred_element_type=jnp.float32)   # (Bt, 4H)
        # PyTorch gate order i, f, g, o — lane-aligned slices when H % 128 == 0.
        i_g = jax.nn.sigmoid(gates[:, 0 * H:1 * H])
        f_g = jax.nn.sigmoid(gates[:, 1 * H:2 * H])
        g_g = jnp.tanh(gates[:, 2 * H:3 * H])
        o_g = jax.nn.sigmoid(gates[:, 3 * H:4 * H])
        c_new = f_g * c_prev + i_g * g_g
        h_new = o_g * jnp.tanh(c_new)
        # packed-sequence semantics: freeze state and emit zeros for t >= length
        valid = t < len_b1                                   # (Bt, 1) bool
        h_sc[...] = jnp.where(valid, h_new, h_prev)
        c_sc[...] = jnp.where(valid, c_new, c_prev)
        slab[t] = jnp.where(valid, h_new, 0.0)
        return carry

    lax.fori_loop(0, T, step, 0)

    # ---- SelfAttention + output head, on the VMEM-resident hidden slab ----
    x = slab[...]                                            # (T, Bt, H) f32
    w_att = jnp.reshape(watt_ref[...], (1, 1, H))
    scores = jnp.tanh(jnp.sum(x * w_att, axis=-1, keepdims=True) + batt_ref[...])  # (T,Bt,1)

    # softmax over the full time axis (as in the reference), then mask by lengths and
    # renormalize (denominator guarded against all-masked rows).
    m = jnp.max(scores, axis=0, keepdims=True)
    e = jnp.exp(scores - m)
    p = e / jnp.sum(e, axis=0, keepdims=True)
    mp = p * mask_ref[...]
    denom = jnp.sum(mp, axis=0, keepdims=True)
    p = mp / jnp.maximum(denom, 1e-30)                       # (T, Bt, 1)

    attn_ref[...] = p.astype(attn_ref.dtype)

    rep = jnp.sum(x * p, axis=0)                             # (Bt, H)
    logits = (jnp.dot(rep, wout_ref[...], preferred_element_type=jnp.float32)
              + bout_ref[...])                               # (Bt, Opad)
    logit_ref[...] = logits.astype(logit_ref.dtype)


def fused_lstm_attention(gates_pre, w_hh_t, w_att_row, b_att, w_out_pad, b_out_pad,
                         lengths_b1, mask_tb1, *, block_b=None):
    T, B, G = gates_pre.shape
    H = w_hh_t.shape[0]
    Opad = w_out_pad.shape[1]
    if block_b is None:
        # Single batch tile for the demo.  For larger batches pick a block_b that is a
        # multiple of 8 (gates sublane dim) and 128 (mask/attn lane dim), or B itself.
        block_b = B
    nb = pl.cdiv(B, block_b)

    grid_spec = pltpu.PrefetchScalarGridSpec(
        num_scalar_prefetch=0,
        grid=(nb,),
        in_specs=[
            pl.BlockSpec((T, block_b, G), lambda i: (0, i, 0)),   # gates (time-major)
            pl.BlockSpec((H, G), lambda i: (0, 0)),               # W_hh^T (constant block)
            pl.BlockSpec((1, H), lambda i: (0, 0)),               # attention vector
            pl.BlockSpec((1, 1), lambda i: (0, 0)),               # attention bias
            pl.BlockSpec((H, Opad), lambda i: (0, 0)),            # output head weight
            pl.BlockSpec((1, Opad), lambda i: (0, 0)),            # output head bias
            pl.BlockSpec((block_b, 1), lambda i: (i, 0)),         # lengths
            pl.BlockSpec((T, block_b, 1), lambda i: (0, i, 0)),   # validity mask
        ],
        out_specs=(
            pl.BlockSpec((block_b, Opad), lambda i: (i, 0)),      # logits (lane-dense)
            pl.BlockSpec((T, block_b, 1), lambda i: (0, i, 0)),   # attention weights
        ),
        scratch_shapes=[
            pltpu.VMEM((T, block_b, H), jnp.float32),             # hidden slab
            pltpu.VMEM((block_b, H), jnp.float32),                # h state
            pltpu.VMEM((block_b, H), jnp.float32),                # c state
        ],
    )
    return pl.pallas_call(
        _fused_lstm_attn_kernel,
        out_shape=(jax.ShapeDtypeStruct((B, Opad), jnp.float32),
                   jax.ShapeDtypeStruct((T, B, 1), jnp.float32)),
        grid_spec=grid_spec,
        compiler_params=pltpu.CompilerParams(dimension_semantics=("parallel",)),
    )(gates_pre, w_hh_t, w_att_row, b_att, w_out_pad, b_out_pad, lengths_b1, mask_tb1)


# ---------------------------------------------------------------------------
# Classifier forward (XLA glue + fused kernel)
# ---------------------------------------------------------------------------
def classifier_forward(params, token_ids, lengths):
    B, T = token_ids.shape
    H = params["w_hh_t"].shape[0]
    O = params["w_out"].shape[1]
    Opad = ((O + 127) // 128) * 128

    # Embed (noise/dropout are eval-mode no-ops).  The gather emits the time-major
    # (T, B, E) layout directly — only the tiny (B, T) int id matrix is transposed.
    emb_tbe = jnp.take(params["embeddings"], token_ids.T, axis=0)        # (T, B, E)

    # Hoisted input projection: ONE large matmul for all timesteps (bf16 in, f32 acc),
    # with the combined bias (b_ih + b_hh) folded in.
    gates_pre = jnp.einsum(
        "tbe,eg->tbg",
        emb_tbe.astype(jnp.bfloat16),
        params["w_ih_t"].astype(jnp.bfloat16),
        preferred_element_type=jnp.float32) + params["bias"]             # (T, B, 4H) f32

    lengths_i32 = lengths.astype(jnp.int32)
    lengths_b1 = lengths_i32.reshape(B, 1)
    mask_tb1 = (jnp.arange(T, dtype=jnp.int32)[:, None] < lengths_i32[None, :]
                ).astype(jnp.float32)[:, :, None]                        # (T, B, 1)

    w_out_pad = jnp.zeros((H, Opad), jnp.float32).at[:, :O].set(params["w_out"])
    b_out_pad = jnp.zeros((1, Opad), jnp.float32).at[:, :O].set(params["b_out"])

    logits_pad, attn_tb1 = fused_lstm_attention(
        gates_pre,
        params["w_hh_t"].astype(jnp.bfloat16),
        params["w_att"].reshape(1, H),
        params["b_att"],
        w_out_pad, b_out_pad,
        lengths_b1, mask_tb1)

    logits = logits_pad[:, :O]                                           # (B, O)
    attentions = jnp.transpose(attn_tb1[:, :, 0], (1, 0))                # (B, T), tiny
    return logits, attentions


def init_params(key, vocab, emb_dim, hidden, out_size):
    ks = jax.random.split(key, 8)
    scale = 0.1
    return {
        "embeddings": jax.random.normal(ks[0], (vocab, emb_dim), jnp.float32) * 0.5,
        # W_ih^T (E, 4H), W_hh^T (H, 4H), combined bias (b_ih + b_hh) as (1, 4H)
        "w_ih_t": jax.random.normal(ks[1], (emb_dim, 4 * hidden), jnp.float32) * scale,
        "w_hh_t": jax.random.normal(ks[2], (hidden, 4 * hidden), jnp.float32) * scale,
        "bias":   jax.random.normal(ks[3], (1, 4 * hidden), jnp.float32) * scale,
        # SelfAttention: Linear(H, 1) + tanh
        "w_att":  jax.random.normal(ks[4], (hidden, 1), jnp.float32) * scale,
        "b_att":  jnp.zeros((1, 1), jnp.float32),
        # output head: Linear(H, out_size)  (stored transposed)
        "w_out":  jax.random.normal(ks[5], (hidden, out_size), jnp.float32) * scale,
        "b_out":  jnp.zeros((1, out_size), jnp.float32),
    }


if __name__ == "__main__":
    B, T = 2, 8
    # encoder_size default in the module is 128 -> lane-aligned gate slices.
    VOCAB, EMB, HIDDEN, OUT = 16, 64, 128, 1

    key = jax.random.PRNGKey(0)
    k_param, k_tok = jax.random.split(key)
    params = init_params(k_param, VOCAB, EMB, HIDDEN, OUT)

    token_ids = jax.random.randint(k_tok, (B, T), 0, VOCAB, dtype=jnp.int32)
    lengths = jnp.array([T, 5], dtype=jnp.int32)

    fwd = jax.jit(classifier_forward)
    logits, attentions = fwd(params, token_ids, lengths)
    logits = jax.block_until_ready(logits)
    attentions = jax.block_until_ready(attentions)

    assert logits.shape == (B, OUT)
    assert attentions.shape == (B, T)
    assert bool(jnp.all(jnp.isfinite(logits))) and bool(jnp.all(jnp.isfinite(attentions)))
    # attention weights are a valid distribution over the first `length` steps
    assert bool(jnp.allclose(jnp.sum(attentions, axis=-1), 1.0, atol=1e-5))
    assert bool(jnp.all(attentions[1, 5:] == 0.0))

    print("KERNEL_OK")
</pallas_src>

<mosaic_0001>
module attributes {stable_mosaic.version = 11 : i64} {
  func.func @_fused_lstm_attn_kernel(%arg0: i32, %arg1: memref<8x2x512xf32, #tpu.memory_space<vmem>>, %arg2: memref<128x512xbf16, #tpu.memory_space<vmem>>, %arg3: memref<1x128xf32, #tpu.memory_space<vmem>>, %arg4: memref<1x1xf32, #tpu.memory_space<vmem>>, %arg5: memref<128x128xf32, #tpu.memory_space<vmem>>, %arg6: memref<1x128xf32, #tpu.memory_space<vmem>>, %arg7: memref<2x1xi32, #tpu.memory_space<vmem>>, %arg8: memref<8x2x1xf32, #tpu.memory_space<vmem>>, %arg9: memref<2x128xf32, #tpu.memory_space<vmem>>, %arg10: memref<8x2x1xf32, #tpu.memory_space<vmem>>, %arg11: memref<8x2x128xf32, #tpu.memory_space<vmem>>, %arg12: memref<2x128xf32, #tpu.memory_space<vmem>>, %arg13: memref<2x128xf32, #tpu.memory_space<vmem>>) attributes {dimension_semantics = [#tpu.dimension_semantics<parallel>], iteration_bounds = array<i64: 1>, scalar_prefetch = 0 : i64, scratch_operands = 3 : i64, tpu.core_type = #tpu.core_type<tc>, window_params = [{transform_indices = @transform_0, window_bounds = array<i64: 8, 2, 512>}, {pipeline_mode = #tpu.pipeline_mode<synchronous>, transform_indices = @transform_1, window_bounds = array<i64: 128, 512>}, {pipeline_mode = #tpu.pipeline_mode<synchronous>, transform_indices = @transform_2, window_bounds = array<i64: 1, 128>}, {pipeline_mode = #tpu.pipeline_mode<synchronous>, transform_indices = @transform_3, window_bounds = array<i64: 1, 1>}, {pipeline_mode = #tpu.pipeline_mode<synchronous>, transform_indices = @transform_4, window_bounds = array<i64: 128, 128>}, {pipeline_mode = #tpu.pipeline_mode<synchronous>, transform_indices = @transform_5, window_bounds = array<i64: 1, 128>}, {transform_indices = @transform_6, window_bounds = array<i64: 2, 1>}, {transform_indices = @transform_7, window_bounds = array<i64: 8, 2, 1>}, {transform_indices = @transform_8, window_bounds = array<i64: 2, 128>}, {transform_indices = @transform_9, window_bounds = array<i64: 8, 2, 1>}]} {
    %cst = arith.constant 0.000000e+00 : f32
    %0 = vector.broadcast %cst : f32 to vector<2x128xf32>
    %c0 = arith.constant 0 : index
    %c0_0 = arith.constant 0 : index
    %1 = vector.load %arg12[%c0, %c0_0] : memref<2x128xf32, #tpu.memory_space<vmem>>, vector<2x128xf32>
    tpu.vector_store %arg12[%c0, %c0_0], %0 {strides = array<i32>} : memref<2x128xf32, #tpu.memory_space<vmem>>, vector<2x128xf32>,
    %cst_1 = arith.constant 0.000000e+00 : f32
    %2 = vector.broadcast %cst_1 : f32 to vector<2x128xf32>
    %c0_2 = arith.constant 0 : index
    %c0_3 = arith.constant 0 : index
    %3 = vector.load %arg13[%c0_2, %c0_3] : memref<2x128xf32, #tpu.memory_space<vmem>>, vector<2x128xf32>
    tpu.vector_store %arg13[%c0_2, %c0_3], %2 {strides = array<i32>} : memref<2x128xf32, #tpu.memory_space<vmem>>, vector<2x128xf32>,
    %c0_4 = arith.constant 0 : index
    %c0_5 = arith.constant 0 : index
    %4 = vector.load %arg7[%c0_4, %c0_5] : memref<2x1xi32, #tpu.memory_space<vmem>>, vector<2x1xi32>
    %c0_i32 = arith.constant 0 : i32
    %c8_i32 = arith.constant 8 : i32
    %5 = arith.addi %c0_i32, %c8_i32 : i32
    %c1_i32 = arith.constant 1 : i32
    scf.for %arg14 = %c0_i32 to %5 step %c1_i32  : i32 {
      %c0_33 = arith.constant 0 : index
      %c0_34 = arith.constant 0 : index
      %45 = vector.load %arg12[%c0_33, %c0_34] : memref<2x128xf32, #tpu.memory_space<vmem>>, vector<2x128xf32>
      %c0_35 = arith.constant 0 : index
      %c0_36 = arith.constant 0 : index
      %46 = vector.load %arg13[%c0_35, %c0_36] : memref<2x128xf32, #tpu.memory_space<vmem>>, vector<2x128xf32>
      %47 = arith.index_cast %arg14 : i32 to index
      %c0_37 = arith.constant 0 : index
      %c0_38 = arith.constant 0 : index
      %48 = vector.load %arg1[%47, %c0_37, %c0_38] : memref<8x2x512xf32, #tpu.memory_space<vmem>>, vector<1x2x512xf32>
      %49 = vector.shape_cast %48 : vector<1x2x512xf32> to vector<2x512xf32>
      %50 = arith.truncf %45 : vector<2x128xf32> to vector<2x128xbf16>
      %c0_39 = arith.constant 0 : index
      %c0_40 = arith.constant 0 : index
      %51 = vector.load %arg2[%c0_39, %c0_40] : memref<128x512xbf16, #tpu.memory_space<vmem>>, vector<128x512xbf16>
      %cst_41 = arith.constant dense<0.000000e+00> : vector<2x512xf32>
      %52 = tpu.matmul %50, %51, %cst_41 {dimension_numbers = #tpu.dot_dimension_numbers<[1], [0], [0], [1], [0, 0, 1, 1], [], []>} : vector<2x128xbf16>, vector<128x512xbf16>, vector<2x512xf32> -> vector<2x512xf32>
      %53 = arith.addf %49, %52 : vector<2x512xf32>
      %54 = vector.extract_strided_slice %53 {offsets = [0, 0], sizes = [2, 128], strides = [1, 1]} : vector<2x512xf32> to vector<2x128xf32>
      %55 = arith.negf %54 : vector<2x128xf32>
      %56 = math.exp %55 : vector<2x128xf32>
      %cst_42 = arith.constant 1.000000e+00 : f32
      %57 = vector.broadcast %cst_42 : f32 to vector<2x128xf32>
      %58 = arith.addf %57, %56 : vector<2x128xf32>
      %59 = arith.divf %57, %58 : vector<2x128xf32>
      %60 = vector.extract_strided_slice %53 {offsets = [0, 128], sizes = [2, 128], strides = [1, 1]} : vector<2x512xf32> to vector<2x128xf32>
      %61 = arith.negf %60 : vector<2x128xf32>
      %62 = math.exp %61 : vector<2x128xf32>
      %cst_43 = arith.constant 1.000000e+00 : f32
      %63 = vector.broadcast %cst_43 : f32 to vector<2x128xf32>
      %64 = arith.addf %63, %62 : vector<2x128xf32>
      %65 = arith.divf %63, %64 : vector<2x128xf32>
      %66 = vector.extract_strided_slice %53 {offsets = [0, 256], sizes = [2, 128], strides = [1, 1]} : vector<2x512xf32> to vector<2x128xf32>
      %67 = math.tanh %66 : vector<2x128xf32>
      %68 = vector.extract_strided_slice %53 {offsets = [0, 384], sizes = [2, 128], strides = [1, 1]} : vector<2x512xf32> to vector<2x128xf32>
      %69 = arith.negf %68 : vector<2x128xf32>
      %70 = math.exp %69 : vector<2x128xf32>
      %cst_44 = arith.constant 1.000000e+00 : f32
      %71 = vector.broadcast %cst_44 : f32 to vector<2x128xf32>
      %72 = arith.addf %71, %70 : vector<2x128xf32>
      %73 = arith.divf %71, %72 : vector<2x128xf32>
      %74 = arith.mulf %65, %46 : vector<2x128xf32>
      %75 = arith.mulf %59, %67 : vector<2x128xf32>
      %76 = arith.addf %74, %75 : vector<2x128xf32>
      %77 = math.tanh %76 : vector<2x128xf32>
      %78 = arith.mulf %73, %77 : vector<2x128xf32>
      %79 = vector.broadcast %arg14 : i32 to vector<2x1xi32>
      %80 = arith.cmpi slt, %79, %4 : vector<2x1xi32>
      %81 = vector.shape_cast %80 : vector<2x1xi1> to vector<2x1xi1>
      %82 = vector.broadcast %81 : vector<2x1xi1> to vector<2x128xi1>
      %83 = arith.select %82, %78, %45 : vector<2x128xi1>, vector<2x128xf32>
      %c0_45 = arith.constant 0 : index
      %c0_46 = arith.constant 0 : index
      %84 = vector.load %arg12[%c0_45, %c0_46] : memref<2x128xf32, #tpu.memory_space<vmem>>, vector<2x128xf32>
      tpu.vector_store %arg12[%c0_45, %c0_46], %83 {strides = array<i32>} : memref<2x128xf32, #tpu.memory_space<vmem>>, vector<2x128xf32>,
      %85 = vector.shape_cast %80 : vector<2x1xi1> to vector<2x1xi1>
      %86 = vector.broadcast %85 : vector<2x1xi1> to vector<2x128xi1>
      %87 = arith.select %86, %76, %46 : vector<2x128xi1>, vector<2x128xf32>
      %c0_47 = arith.constant 0 : index
      %c0_48 = arith.constant 0 : index
      %88 = vector.load %arg13[%c0_47, %c0_48] : memref<2x128xf32, #tpu.memory_space<vmem>>, vector<2x128xf32>
      tpu.vector_store %arg13[%c0_47, %c0_48], %87 {strides = array<i32>} : memref<2x128xf32, #tpu.memory_space<vmem>>, vector<2x128xf32>,
      %cst_49 = arith.constant 0.000000e+00 : f32
      %89 = vector.shape_cast %80 : vector<2x1xi1> to vector<2x1xi1>
      %90 = vector.broadcast %89 : vector<2x1xi1> to vector<2x128xi1>
      %91 = vector.broadcast %cst_49 : f32 to vector<2x128xf32>
      %92 = arith.select %90, %78, %91 : vector<2x128xi1>, vector<2x128xf32>
      %93 = arith.index_cast %arg14 : i32 to index
      %c0_50 = arith.constant 0 : index
      %c0_51 = arith.constant 0 : index
      %94 = vector.load %arg11[%93, %c0_50, %c0_51] : memref<8x2x128xf32, #tpu.memory_space<vmem>>, vector<1x2x128xf32>
      %95 = vector.shape_cast %94 : vector<1x2x128xf32> to vector<2x128xf32>
      %96 = vector.shape_cast %92 : vector<2x128xf32> to vector<1x2x128xf32>
      tpu.vector_store %arg11[%93, %c0_50, %c0_51], %96 {strides = array<i32>} : memref<8x2x128xf32, #tpu.memory_space<vmem>>, vector<1x2x128xf32>,
    }
    %c8_i32_6 = arith.constant 8 : i32
    %c0_7 = arith.constant 0 : index
    %c0_8 = arith.constant 0 : index
    %c0_9 = arith.constant 0 : index
    %6 = vector.load %arg11[%c0_7, %c0_8, %c0_9] : memref<8x2x128xf32, #tpu.memory_space<vmem>>, vector<8x2x128xf32>
    %c0_10 = arith.constant 0 : index
    %c0_11 = arith.constant 0 : index
    %7 = vector.load %arg3[%c0_10, %c0_11] : memref<1x128xf32, #tpu.memory_space<vmem>>, vector<1x128xf32>
    %8 = vector.shape_cast %7 : vector<1x128xf32> to vector<1x1x128xf32>
    %9 = vector.broadcast %8 : vector<1x1x128xf32> to vector<8x2x128xf32>
    %10 = arith.mulf %6, %9 : vector<8x2x128xf32>
    %cst_12 = arith.constant dense<0.000000e+00> : vector<8x2xf32>
    %11 = vector.multi_reduction <add>, %10, %cst_12 [2] : vector<8x2x128xf32> to vector<8x2xf32>
    %12 = vector.shape_cast %11 : vector<8x2xf32> to vector<8x2x1xf32>
    %c0_13 = arith.constant 0 : index
    %c0_14 = arith.constant 0 : index
    %13 = vector.load %arg4[%c0_13, %c0_14] : memref<1x1xf32, #tpu.memory_space<vmem>>, vector<1x1xf32>
    %14 = vector.shape_cast %13 : vector<1x1xf32> to vector<1x1x1xf32>
    %15 = vector.broadcast %14 : vector<1x1x1xf32> to vector<8x2x1xf32>
    %16 = arith.addf %12, %15 : vector<8x2x1xf32>
    %17 = math.tanh %16 : vector<8x2x1xf32>
    %cst_15 = arith.constant dense<0xFF800000> : vector<2x1xf32>
    %18 = vector.multi_reduction <maximumf>, %17, %cst_15 [0] : vector<8x2x1xf32> to vector<2x1xf32>
    %19 = vector.shape_cast %18 : vector<2x1xf32> to vector<1x2x1xf32>
    %20 = vector.broadcast %19 : vector<1x2x1xf32> to vector<8x2x1xf32>
    %21 = arith.subf %17, %20 : vector<8x2x1xf32>
    %22 = math.exp %21 : vector<8x2x1xf32>
    %cst_16 = arith.constant dense<0.000000e+00> : vector<2x1xf32>
    %23 = vector.multi_reduction <add>, %22, %cst_16 [0] : vector<8x2x1xf32> to vector<2x1xf32>
    %24 = vector.shape_cast %23 : vector<2x1xf32> to vector<1x2x1xf32>
    %25 = vector.broadcast %24 : vector<1x2x1xf32> to vector<8x2x1xf32>
    %26 = arith.divf %22, %25 : vector<8x2x1xf32>
    %c0_17 = arith.constant 0 : index
    %c0_18 = arith.constant 0 : index
    %c0_19 = arith.constant 0 : index
    %27 = vector.load %arg8[%c0_17, %c0_18, %c0_19] : memref<8x2x1xf32, #tpu.memory_space<vmem>>, vector<8x2x1xf32>
    %28 = arith.mulf %26, %27 : vector<8x2x1xf32>
    %cst_20 = arith.constant dense<0.000000e+00> : vector<2x1xf32>
    %29 = vector.multi_reduction <add>, %28, %cst_20 [0] : vector<8x2x1xf32> to vector<2x1xf32>
    %30 = vector.shape_cast %29 : vector<2x1xf32> to vector<1x2x1xf32>
    %cst_21 = arith.constant 1.000000e-30 : f32
    %31 = vector.broadcast %cst_21 : f32 to vector<1x2x1xf32>
    %32 = arith.maximumf %30, %31 : vector<1x2x1xf32>
    %33 = vector.broadcast %32 : vector<1x2x1xf32> to vector<8x2x1xf32>
    %34 = arith.divf %28, %33 : vector<8x2x1xf32>
    %c0_22 = arith.constant 0 : index
    %c0_23 = arith.constant 0 : index
    %c0_24 = arith.constant 0 : index
    %35 = vector.load %arg10[%c0_22, %c0_23, %c0_24] : memref<8x2x1xf32, #tpu.memory_space<vmem>>, vector<8x2x1xf32>
    tpu.vector_store %arg10[%c0_22, %c0_23, %c0_24], %34 {strides = array<i32>} : memref<8x2x1xf32, #tpu.memory_space<vmem>>, vector<8x2x1xf32>,
    %36 = vector.broadcast %34 : vector<8x2x1xf32> to vector<8x2x128xf32>
    %37 = arith.mulf %6, %36 : vector<8x2x128xf32>
    %cst_25 = arith.constant dense<0.000000e+00> : vector<2x128xf32>
    %38 = vector.multi_reduction <add>, %37, %cst_25 [0] : vector<8x2x128xf32> to vector<2x128xf32>
    %c0_26 = arith.constant 0 : index
    %c0_27 = arith.constant 0 : index
    %39 = vector.load %arg5[%c0_26, %c0_27] : memref<128x128xf32, #tpu.memory_space<vmem>>, vector<128x128xf32>
    %cst_28 = arith.constant dense<0.000000e+00> : vector<2x128xf32>
    %40 = tpu.matmul %38, %39, %cst_28 {dimension_numbers = #tpu.dot_dimension_numbers<[1], [0], [0], [1], [0, 0, 1, 1], [], []>} : vector<2x128xf32>, vector<128x128xf32>, vector<2x128xf32> -> vector<2x128xf32>
    %c0_29 = arith.constant 0 : index
    %c0_30 = arith.constant 0 : index
    %41 = vector.load %arg6[%c0_29, %c0_30] : memref<1x128xf32, #tpu.memory_space<vmem>>, vector<1x128xf32>
    %42 = vector.broadcast %41 : vector<1x128xf32> to vector<2x128xf32>
    %43 = arith.addf %40, %42 : vector<2x128xf32>
    %c0_31 = arith.constant 0 : index
    %c0_32 = arith.constant 0 : index
    %44 = vector.load %arg9[%c0_31, %c0_32] : memref<2x128xf32, #tpu.memory_space<vmem>>, vector<2x128xf32>
    tpu.vector_store %arg9[%c0_31, %c0_32], %43 {strides = array<i32>} : memref<2x128xf32, #tpu.memory_space<vmem>>, vector<2x128xf32>,
    return
  }
  func.func @transform_0(%arg0: i32) -> (i32, i32, i32) {
    %c0_i32 = arith.constant 0 : i32
    %c0_i32_0 = arith.constant 0 : i32
    %c0_i32_1 = arith.constant 0 : i32
    return %c0_i32, %arg0, %c0_i32_0 : i32, i32, i32
  }
  func.func @transform_1(%arg0: i32) -> (i32, i32) {
    %c0_i32 = arith.constant 0 : i32
    %c0_i32_0 = arith.constant 0 : i32
    %c0_i32_1 = arith.constant 0 : i32
    return %c0_i32, %c0_i32_0 : i32, i32
  }
  func.func @transform_2(%arg0: i32) -> (i32, i32) {
    %c0_i32 = arith.constant 0 : i32
    %c0_i32_0 = arith.constant 0 : i32
    %c0_i32_1 = arith.constant 0 : i32
    return %c0_i32, %c0_i32_0 : i32, i32
  }
  func.func @transform_3(%arg0: i32) -> (i32, i32) {
    %c0_i32 = arith.constant 0 : i32
    %c0_i32_0 = arith.constant 0 : i32
    %c0_i32_1 = arith.constant 0 : i32
    return %c0_i32, %c0_i32_0 : i32, i32
  }
  func.func @transform_4(%arg0: i32) -> (i32, i32) {
    %c0_i32 = arith.constant 0 : i32
    %c0_i32_0 = arith.constant 0 : i32
    %c0_i32_1 = arith.constant 0 : i32
    return %c0_i32, %c0_i32_0 : i32, i32
  }
  func.func @transform_5(%arg0: i32) -> (i32, i32) {
    %c0_i32 = arith.constant 0 : i32
    %c0_i32_0 = arith.constant 0 : i32
    %c0_i32_1 = arith.constant 0 : i32
    return %c0_i32, %c0_i32_0 : i32, i32
  }
  func.func @transform_6(%arg0: i32) -> (i32, i32) {
    %c0_i32 = arith.constant 0 : i32
    %c0_i32_0 = arith.constant 0 : i32
    return %arg0, %c0_i32 : i32, i32
  }
  func.func @transform_7(%arg0: i32) -> (i32, i32, i32) {
    %c0_i32 = arith.constant 0 : i32
    %c0_i32_0 = arith.constant 0 : i32
    %c0_i32_1 = arith.constant 0 : i32
    return %c0_i32, %arg0, %c0_i32_0 : i32, i32, i32
  }
  func.func @transform_8(%arg0: i32) -> (i32, i32) {
    %c0_i32 = arith.constant 0 : i32
    %c0_i32_0 = arith.constant 0 : i32
    return %arg0, %c0_i32 : i32, i32
  }
  func.func @transform_9(%arg0: i32) -> (i32, i32, i32) {
    %c0_i32 = arith.constant 0 : i32
    %c0_i32_0 = arith.constant 0 : i32
    %c0_i32_1 = arith.constant 0 : i32
    return %c0_i32, %arg0, %c0_i32_0 : i32, i32, i32
  }
}

</mosaic_0001>

<llo_original>
// kernel: classifier_forward.1
$region0: #{classifier_forward.1}
  #allocation0 [shape = 'u32[]', space=smem, size = 0x4, offset = 0x4, fixed_abs, tag = 'smem constant byte address 0x4 - core index']
  #allocation1 [shape = 'u32[144,128]{1,0:T(1,128)}', space=vmem, size = 0x12000, scoped, tag = 'internal scratch']
  #allocation2 [shape = 'f32[8,2,128]{2,1,0:T(2,128)}', space=vmem, size = 0x2000, scoped, tag = 'scratch operand']
  #allocation3 [shape = 'f32[2,128]{1,0:T(2,128)}', space=vmem, size = 0x400, scoped, tag = 'scratch operand']
  #allocation4 [shape = 'f32[2,128]{1,0:T(2,128)}', space=vmem, size = 0x400, scoped, tag = 'scratch operand']
  #allocation5 [shape = 'f32[1,1]{1,0:T(1,128)S(1)}', space=vmem, size = 0x200, scoped, tag = 'scoped memory for classifier_forward.1']
  %s0 = inlined_call_operand.vmem [shape: f32[8,2,512], index: 0, kind: input, shape index: {}]
  %s1 = inlined_call_operand.vmem [shape: bf16[128,512], index: 1, kind: input, shape index: {}]
  %s2 = inlined_call_operand.vmem [shape: f32[1,128], index: 2, kind: input, shape index: {}]
  %s3 = inlined_call_operand.<no memory space> [shape: f32[1,1], index: 3, kind: input, shape index: {}]
  %s4 = inlined_call_operand.vmem [shape: f32[128,128], index: 4, kind: input, shape index: {}]
  %s5 = inlined_call_operand.vmem [shape: f32[1,128], index: 5, kind: input, shape index: {}]
  %s6 = inlined_call_operand.vmem [shape: s32[2,1], index: 6, kind: input, shape index: {}]
  %s7 = inlined_call_operand.vmem [shape: f32[8,2,1], index: 7, kind: input, shape index: {}]
  %s8 = inlined_call_operand.vmem [shape: f32[2,128], index: 8, kind: output, shape index: {0}]
  %s9 = inlined_call_operand.vmem [shape: f32[8,2,1], index: 9, kind: output, shape index: {1}]
  %10 = xla_tuple %s8, %s9
  %s11 = sld [smem:[#allocation0]]
  $region57: #{classifier_forward.1} parent=0
    _
  %s13 = ssub.s32 1, %s11
  %s14 = scalar_select 0, %s13, %s11
  %v15 = vstv %s3
  %16 = vst [vmem:[#allocation5] sm:$0x1] %v15
  // Predicated region
  $region2: #{classifier_forward.1} parent=0 // pred_check
    _
  $region3: #{classifier_forward.1} parent=0 // pred_check_branch
    %18 = sbr.rel (0) target = $region5
  $region4: #{classifier_forward.1} parent=0 // pred_region
    _
  $region5: #{classifier_forward.1} parent=0 // pred_fallthru
    _
  // Predicated region
  $region6: #{classifier_forward.1} parent=0 // pred_check
    _
  $region7: #{classifier_forward.1} parent=0 // pred_check_branch
    %20 = sbr.rel (0) target = $region9
  $region8: #{classifier_forward.1} parent=0 // pred_region
    _
  $region9: #{classifier_forward.1} parent=0 // pred_fallthru
    _
  // Predicated region
  $region10: #{classifier_forward.1} parent=0 // pred_check
    _
  $region11: #{classifier_forward.1} parent=0 // pred_check_branch
    %22 = sbr.rel (0) target = $region13
  $region12: #{classifier_forward.1} parent=0 // pred_region
    _
  $region13: #{classifier_forward.1} parent=0 // pred_fallthru
    _
  // Predicated region
  $region14: #{classifier_forward.1} parent=0 // pred_check
    _
  $region15: #{classifier_forward.1} parent=0 // pred_check_branch
    %24 = sbr.rel (0) target = $region17
  $region16: #{classifier_forward.1} parent=0 // pred_region
    _
  $region17: #{classifier_forward.1} parent=0 // pred_fallthru
    _
  // Predicated region
  $region18: #{classifier_forward.1} parent=0 // pred_check
    _
  $region19: #{classifier_forward.1} parent=0 // pred_check_branch
    %26 = sbr.rel (0) target = $region21
  $region20: #{classifier_forward.1} parent=0 // pred_region
    _
  $region21: #{classifier_forward.1} parent=0 // pred_fallthru
    _
  // Predicated region
  $region22: #{classifier_forward.1} parent=0 // pred_check
    _
  $region23: #{classifier_forward.1} parent=0 // pred_check_branch
    %28 = sbr.rel (0) target = $region25
  $region24: #{classifier_forward.1} parent=0 // pred_region
    _
  $region25: #{classifier_forward.1} parent=0 // pred_fallthru
    _
  // Predicated region
  $region26: #{classifier_forward.1} parent=0 // pred_check
    _
  $region27: #{classifier_forward.1} parent=0 // pred_check_branch
    %30 = sbr.rel (0) target = $region29
  $region28: #{classifier_forward.1} parent=0 // pred_region
    _
  $region29: #{classifier_forward.1} parent=0 // pred_fallthru
    _
  // Predicated region
  $region30: #{classifier_forward.1} parent=0 // pred_check
    _
  $region31: #{classifier_forward.1} parent=0 // pred_check_branch
    %32 = sbr.rel (0) target = $region33
  $region32: #{classifier_forward.1} parent=0 // pred_region
    _
  $region33: #{classifier_forward.1} parent=0 // pred_fallthru
    _
  %34 = vst [vmem:[#allocation3] sm:$0x3] 0.0
  %35 = vst [vmem:[#allocation4] sm:$0x3] 0.0
  %v36 = vld [vmem:[%s6] sm:$0x3]
  loop: start=0, step=1, limit=8
  $region34: #{classifier_forward.1} parent=0 // loop_pre_header
    _
  $region35: #{classifier_forward.1} parent=0 // loop_header
    %s38 = sphi 0, %s42
    %p39 = scmp.ge.s32.totalorder %s38, 8
  $region36: #{classifier_forward.1} parent=0 // loop_header_branch
    %41 = sbr.rel (%p39) target = $region40
  $region37: #{classifier_forward.1} parent=0 // loop_body
    %v43 = vld [vmem:[#allocation3] sm:$0x3]
    %v44 = vld [vmem:[#allocation4] sm:$0x3]
    %s45 = smul.u32 %s38, 4
    %s46 = smul.addr %s45, 2
    %s47 = scalar_lea.vmem %s0, %s46
    %v48 = vld [vmem:[%s47] sm:$0xff]
    %v49 = vpack.c.bf16 %v43, %v43
    %v50 = vld [vmem:[%s1] sm:$0xff]
    %v51 = vld [vmem:[%s1 + $0x8] sm:$0xff]
    %v52 = vld [vmem:[%s1 + $0x10] sm:$0xff]
    %v53 = vld [vmem:[%s1 + $0x18] sm:$0xff]
    %v54 = vld [vmem:[%s1 + $0x20] sm:$0xff]
    %v55 = vld [vmem:[%s1 + $0x28] sm:$0xff]
    %v56 = vld [vmem:[%s1 + $0x30] sm:$0xff]
    %v57 = vld [vmem:[%s1 + $0x38] sm:$0xff]
    %v58 = vld [vmem:[%s1 + $0x40] sm:$0xff]
    %v59 = vld [vmem:[%s1 + $0x48] sm:$0xff]
    %v60 = vld [vmem:[%s1 + $0x50] sm:$0xff]
    %v61 = vld [vmem:[%s1 + $0x58] sm:$0xff]
    %v62 = vld [vmem:[%s1 + $0x60] sm:$0xff]
    %v63 = vld [vmem:[%s1 + $0x68] sm:$0xff]
    %v64 = vld [vmem:[%s1 + $0x70] sm:$0xff]
    %v65 = vld [vmem:[%s1 + $0x78] sm:$0xff]
    %v66 = vld [vmem:[%s1 + $0x80] sm:$0xff]
    %v67 = vld [vmem:[%s1 + $0x88] sm:$0xff]
    %v68 = vld [vmem:[%s1 + $0x90] sm:$0xff]
    %v69 = vld [vmem:[%s1 + $0x98] sm:$0xff]
    %v70 = vld [vmem:[%s1 + $0xa0] sm:$0xff]
    %v71 = vld [vmem:[%s1 + $0xa8] sm:$0xff]
    %v72 = vld [vmem:[%s1 + $0xb0] sm:$0xff]
    %v73 = vld [vmem:[%s1 + $0xb8] sm:$0xff]
    %v74 = vld [vmem:[%s1 + $0xc0] sm:$0xff]
    %v75 = vld [vmem:[%s1 + $0xc8] sm:$0xff]
    %v76 = vld [vmem:[%s1 + $0xd0] sm:$0xff]
    %v77 = vld [vmem:[%s1 + $0xd8] sm:$0xff]
    %v78 = vld [vmem:[%s1 + $0xe0] sm:$0xff]
    %v79 = vld [vmem:[%s1 + $0xe8] sm:$0xff]
    %v80 = vld [vmem:[%s1 + $0xf0] sm:$0xff]
    %v81 = vld [vmem:[%s1 + $0xf8] sm:$0xff]
    %v114 = vunpack.c.l.b16 %v50
    %v115 = vunpack.c.h.b16 %v50
    %v116 = vunpack.c.l.b16 %v51
    %v117 = vunpack.c.h.b16 %v51
    %v118 = vunpack.c.l.b16 %v52
    %v119 = vunpack.c.h.b16 %v52
    %v120 = vunpack.c.l.b16 %v53
    %v121 = vunpack.c.h.b16 %v53
    %v122 = vunpack.c.l.b16 %v54
    %v123 = vunpack.c.h.b16 %v54
    %v124 = vunpack.c.l.b16 %v55
    %v125 = vunpack.c.h.b16 %v55
    %v126 = vunpack.c.l.b16 %v56
    %v127 = vunpack.c.h.b16 %v56
    %v128 = vunpack.c.l.b16 %v57
    %v129 = vunpack.c.h.b16 %v57
    %v130 = vunpack.c.l.b16 %v58
    %v131 = vunpack.c.h.b16 %v58
    %v132 = vunpack.c.l.b16 %v59
    %v133 = vunpack.c.h.b16 %v59
    %v134 = vunpack.c.l.b16 %v60
    %v135 = vunpack.c.h.b16 %v60
    %v136 = vunpack.c.l.b16 %v61
    %v137 = vunpack.c.h.b16 %v61
    %v138 = vunpack.c.l.b16 %v62
    %v139 = vunpack.c.h.b16 %v62
    %v140 = vunpack.c.l.b16 %v63
    %v141 = vunpack.c.h.b16 %v63
    %v142 = vunpack.c.l.b16 %v64
    %v143 = vunpack.c.h.b16 %v64
    %v144 = vunpack.c.l.b16 %v65
    %v145 = vunpack.c.h.b16 %v65
    %v146 = vunpack.c.l.b16 %v66
    %v147 = vunpack.c.h.b16 %v66
    %v148 = vunpack.c.l.b16 %v67
    %v149 = vunpack.c.h.b16 %v67
    %v150 = vunpack.c.l.b16 %v68
    %v151 = vunpack.c.h.b16 %v68
    %v152 = vunpack.c.l.b16 %v69
    %v153 = vunpack.c.h.b16 %v69
    %v154 = vunpack.c.l.b16 %v70
    %v155 = vunpack.c.h.b16 %v70
    %v156 = vunpack.c.l.b16 %v71
    %v157 = vunpack.c.h.b16 %v71
    %v158 = vunpack.c.l.b16 %v72
    %v159 = vunpack.c.h.b16 %v72
    %v160 = vunpack.c.l.b16 %v73
    %v161 = vunpack.c.h.b16 %v73
    %v162 = vunpack.c.l.b16 %v74
    %v163 = vunpack.c.h.b16 %v74
    %v164 = vunpack.c.l.b16 %v75
    %v165 = vunpack.c.h.b16 %v75
    %v166 = vunpack.c.l.b16 %v76
    %v167 = vunpack.c.h.b16 %v76
    %v168 = vunpack.c.l.b16 %v77
    %v169 = vunpack.c.h.b16 %v77
    %v170 = vunpack.c.l.b16 %v78
    %v171 = vunpack.c.h.b16 %v78
    %v172 = vunpack.c.l.b16 %v79
    %v173 = vunpack.c.h.b16 %v79
    %v174 = vunpack.c.l.b16 %v80
    %v175 = vunpack.c.h.b16 %v80
    %v176 = vunpack.c.l.b16 %v81
    %v177 = vunpack.c.h.b16 %v81
    %v178 = vpack.c.b16 %v118, %v114
    %v179 = vpack.c.b16 %v119, %v115
    %v180 = vpack.c.b16 %v120, %v116
    %v181 = vpack.c.b16 %v121, %v117
    %v182 = vpack.c.b16 %v126, %v122
    %v183 = vpack.c.b16 %v127, %v123
    %v184 = vpack.c.b16 %v128, %v124
    %v185 = vpack.c.b16 %v129, %v125
    %v186 = vpack.c.b16 %v134, %v130
    %v187 = vpack.c.b16 %v135, %v131
    %v188 = vpack.c.b16 %v136, %v132
    %v189 = vpack.c.b16 %v137, %v133
    %v190 = vpack.c.b16 %v142, %v138
    %v191 = vpack.c.b16 %v143, %v139
    %v192 = vpack.c.b16 %v144, %v140
    %v193 = vpack.c.b16 %v145, %v141
    %v194 = vpack.c.b16 %v150, %v146
    %v195 = vpack.c.b16 %v151, %v147
    %v196 = vpack.c.b16 %v152, %v148
    %v197 = vpack.c.b16 %v153, %v149
    %v198 = vpack.c.b16 %v158, %v154
    %v199 = vpack.c.b16 %v159, %v155
    %v200 = vpack.c.b16 %v160, %v156
    %v201 = vpack.c.b16 %v161, %v157
    %v202 = vpack.c.b16 %v166, %v162
    %v203 = vpack.c.b16 %v167, %v163
    %v204 = vpack.c.b16 %v168, %v164
    %v205 = vpack.c.b16 %v169, %v165
    %v206 = vpack.c.b16 %v174, %v170
    %v207 = vpack.c.b16 %v175, %v171
    %v208 = vpack.c.b16 %v176, %v172
    %v209 = vpack.c.b16 %v177, %v173
    %242 = vmatprep.subr.bf16.mxu0 %v179
    %243 = vmatpush1.bf16.msra.mxu0 %v178
    %244 = vmatprep.subr.bf16.mxu0 %v183
    %245 = vmatpush1.bf16.msra.mxu0 %v182
    %246 = vmatprep.subr.bf16.mxu0 %v187
    %247 = vmatpush1.bf16.msra.mxu0 %v186
    %248 = vmatprep.subr.bf16.mxu0 %v191
    %249 = vmatpush1.bf16.msra.mxu0 %v190
    %250 = vmatprep.subr.bf16.mxu0 %v195
    %251 = vmatpush1.bf16.msra.mxu0 %v194
    %252 = vmatprep.subr.bf16.mxu0 %v199
    %253 = vmatpush1.bf16.msra.mxu0 %v198
    %254 = vmatprep.subr.bf16.mxu0 %v203
    %255 = vmatpush1.bf16.msra.mxu0 %v202
    %256 = vmatprep.subr.bf16.mxu0 %v207
    %257 = vmatpush1.bf16.msra.mxu0 %v206
    %258 = vmatprep.subr.bf16.mxu0 0
    %259 = vmatpush1.bf16.msra.mxu0 0
    %260 = vmatprep.subr.bf16.mxu0 0
    %261 = vmatpush1.bf16.msra.mxu0 0
    %262 = vmatprep.subr.bf16.mxu0 0
    %263 = vmatpush1.bf16.msra.mxu0 0
    %264 = vmatprep.subr.bf16.mxu0 0
    %265 = vmatpush1.bf16.msra.mxu0 0
    %266 = vmatprep.subr.bf16.mxu0 0
    %267 = vmatpush1.bf16.msra.mxu0 0
    %268 = vmatprep.subr.bf16.mxu0 0
    %269 = vmatpush1.bf16.msra.mxu0 0
    %270 = vmatprep.subr.bf16.mxu0 0
    %271 = vmatpush1.bf16.msra.mxu0 0
    %272 = vmatprep.subr.bf16.mxu0 0
    %273 = vmatpush1.bf16.msra.mxu0 0
    %274 = vmatprep.mubr.bf16.mxu0 0
    %275 = vmatmul.mubr.bf16.gmra.mrb[0].mxu0 %v49
    %v276 = vpop.f32.mrb[0].mxu0
    %v277 = vadd.f32 0.0, %v276
    %v278 = vpop.f32.mrb[0].mxu0
    %v279 = vadd.f32 0.0, %v278
    %v280 = vpop.f32.mrb[0].mxu0
    %v281 = vpop.f32.mrb[0].mxu0
    %282 = vdwg.mxu0
    %283 = vmatprep.subr.bf16.mxu0 %v181
    %284 = vmatpush1.bf16.msra.mxu0 %v180
    %285 = vmatprep.subr.bf16.mxu0 %v185
    %286 = vmatpush1.bf16.msra.mxu0 %v184
    %287 = vmatprep.subr.bf16.mxu0 %v189
    %288 = vmatpush1.bf16.msra.mxu0 %v188
    %289 = vmatprep.subr.bf16.mxu0 %v193
    %290 = vmatpush1.bf16.msra.mxu0 %v192
    %291 = vmatprep.subr.bf16.mxu0 %v197
    %292 = vmatpush1.bf16.msra.mxu0 %v196
    %293 = vmatprep.subr.bf16.mxu0 %v201
    %294 = vmatpush1.bf16.msra.mxu0 %v200
    %295 = vmatprep.subr.bf16.mxu0 %v205
    %296 = vmatpush1.bf16.msra.mxu0 %v204
    %297 = vmatprep.subr.bf16.mxu0 %v209
    %298 = vmatpush1.bf16.msra.mxu0 %v208
    %299 = vmatprep.subr.bf16.mxu0 0
    %300 = vmatpush1.bf16.msra.mxu0 0
    %301 = vmatprep.subr.bf16.mxu0 0
    %302 = vmatpush1.bf16.msra.mxu0 0
    %303 = vmatprep.subr.bf16.mxu0 0
    %304 = vmatpush1.bf16.msra.mxu0 0
    %305 = vmatprep.subr.bf16.mxu0 0
    %306 = vmatpush1.bf16.msra.mxu0 0
    %307 = vmatprep.subr.bf16.mxu0 0
    %308 = vmatpush1.bf16.msra.mxu0 0
    %309 = vmatprep.subr.bf16.mxu0 0
    %310 = vmatpush1.bf16.msra.mxu0 0
    %311 = vmatprep.subr.bf16.mxu0 0
    %312 = vmatpush1.bf16.msra.mxu0 0
    %313 = vmatprep.subr.bf16.mxu0 0
    %314 = vmatpush1.bf16.msra.mxu0 0
    %315 = vmatprep.mubr.bf16.mxu0 0
    %316 = vmatmul.mubr.bf16.gmra.mrb[0].mxu0 %v49
    %v317 = vpop.f32.mrb[0].mxu0
    %v318 = vadd.f32 0.0, %v317
    %v319 = vpop.f32.mrb[0].mxu0
    %v320 = vadd.f32 0.0, %v319
    %v321 = vpop.f32.mrb[0].mxu0
    %v322 = vpop.f32.mrb[0].mxu0
    %323 = vdwg.mxu0
    %v328 = vcombine.low %v277, %v279
    %v329 = vcombine.low %v318, %v320
    %v331 = vunpack.c.l.s4 1983009808
    %v332 = vunpack.c.0.s8 %v331
    %v333 = vlaneseq
    %v334 = vshrl.u32 %v333, 7
    %v335 = vsub.s32 %v332, %v334
    %v336 = vrot.slane %v328, %v335
    %v338 = vunpack.c.l.s4 1983009808
    %v339 = vunpack.c.0.s8 %v338
    %v340 = vlaneseq
    %v341 = vshrl.u32 %v340, 7
    %v342 = vsub.s32 %v339, %v341
    %v343 = vrot.slane %v329, %v342
    %v344 = vcombine.low %v336, %v343
    %v346 = vadd.f32 %v48, %v344
    %v347 = vxor.u32 %v346, 2147483648
    %v348 = vmul.f32 %v347, 1.442695
    %v349 = vpow.pop %v348
    %v350 = vadd.f32 %v349, 1.0
    %v351 = vrcp.pop %v350
    %v352 = vmul.f32 1.0, %v351
    %v354 = vrot.slane %v346, 2
    %v356 = vxor.u32 %v354, 2147483648
    %v357 = vmul.f32 %v356, 1.442695
    %v358 = vpow.pop %v357
    %v359 = vadd.f32 %v358, 1.0
    %v360 = vrcp.pop %v359
    %v361 = vmul.f32 1.0, %v360
    %v362 = vrot.slane %v346, 4
    %v364 = vtanh.pop %v362
    %v365 = vrot.slane %v346, 6
    %v367 = vxor.u32 %v365, 2147483648
    %v368 = vmul.f32 %v367, 1.442695
    %v369 = vpow.pop %v368
    %v370 = vadd.f32 %v369, 1.0
    %v371 = vrcp.pop %v370
    %v372 = vmul.f32 1.0, %v371
    %v373 = vmul.f32 %v361, %v44
    %v374 = vmul.f32 %v352, %v364
    %v375 = vadd.f32 %v373, %v374
    %v376 = vtanh.pop %v375
    %v377 = vmul.f32 %v372, %v376
    %v378 = vstv %s38
    %vm379 = vcmp.lt.s32.totalorder %v378, %v36
    %v380 = vsel %vm379, 1, 0
    %381 = vset.pattern.permute.xlu0 0
    %382 = vperm.xlu0 %381, %v380
    %v383 = vpop.permute.xlu0 %382
    %vm384 = vcmp.eq.s32.totalorder %v383, 1
    %v385 = vsel %vm384, %v377, %v43
    %386 = vst [vmem:[#allocation3] sm:$0x3] %v385
    %v387 = vsel %vm384, %v375, %v44
    %388 = vst [vmem:[#allocation4] sm:$0x3] %v387
    %v389 = vsel %vm384, %v377, 0.0
    %s390 = smul.u32 %s38, 2
    %s391 = scalar_lea.vmem [#allocation2], %s390
    %392 = vst [vmem:[%s391] sm:$0x3] %v389
  $region38: #{classifier_forward.1} parent=0 // loop_footer
    %s42 = sadd.s32 1, %s38
  $region39: #{classifier_forward.1} parent=0 // loop_footer_branch
    %37 = sbr.rel target = $region35
  $region40: #{classifier_forward.1} parent=0 // loop_exit
    _
  %v393 = vld [vmem:[#allocation2] sm:$0x3]
  %v394 = vld [vmem:[#allocation2 + $0x2] sm:$0x3]
  %v395 = vld [vmem:[#allocation2 + $0x4] sm:$0x3]
  %v396 = vld [vmem:[#allocation2 + $0x6] sm:$0x3]
  %v397 = vld [vmem:[#allocation2 + $0x8] sm:$0x3]
  %v398 = vld [vmem:[#allocation2 + $0xa] sm:$0x3]
  %v399 = vld [vmem:[#allocation2 + $0xc] sm:$0x3]
  %v400 = vld [vmem:[#allocation2 + $0xe] sm:$0x3]
  %v401 = vld [vmem:[%s2] sm:$0x1]
  %v403 = vlaneseq
  %v404 = vshrl.u32 %v403, 7
  %v405 = vsub.s32 0, %v404
  %v406 = vrot.slane %v401, %v405
  %v408 = vmul.f32 %v393, %v406
  %v409 = vmul.f32 %v394, %v406
  %v410 = vmul.f32 %v395, %v406
  %v411 = vmul.f32 %v396, %v406
  %v412 = vmul.f32 %v397, %v406
  %v413 = vmul.f32 %v398, %v406
  %v414 = vmul.f32 %v399, %v406
  %v415 = vmul.f32 %v400, %v406
  %vm416 = vcmask 1041408
  %v417 = vsel %vm416, %v408, 0.0
  %418 = vadd.xlane.f32.xlu0 %v417
  %v419 = vpop.xlane.xlu0 %418
  %v420 = vsel %vm416, %v409, 0.0
  %421 = vadd.xlane.f32.xlu0 %v420
  %v422 = vpop.xlane.xlu0 %421
  %v423 = vsel %vm416, %v410, 0.0
  %424 = vadd.xlane.f32.xlu0 %v423
  %v425 = vpop.xlane.xlu0 %424
  %v426 = vsel %vm416, %v411, 0.0
  %427 = vadd.xlane.f32.xlu0 %v426
  %v428 = vpop.xlane.xlu0 %427
  %v429 = vsel %vm416, %v412, 0.0
  %430 = vadd.xlane.f32.xlu0 %v429
  %v431 = vpop.xlane.xlu0 %430
  %v432 = vsel %vm416, %v413, 0.0
  %433 = vadd.xlane.f32.xlu0 %v432
  %v434 = vpop.xlane.xlu0 %433
  %v435 = vsel %vm416, %v414, 0.0
  %436 = vadd.xlane.f32.xlu0 %v435
  %v437 = vpop.xlane.xlu0 %436
  %v438 = vsel %vm416, %v415, 0.0
  %439 = vadd.xlane.f32.xlu0 %v438
  %v440 = vpop.xlane.xlu0 %439
  %v441 = vld [vmem:[#allocation5] sm:$0x1]
  %v443 = vlaneseq
  %v444 = vshrl.u32 %v443, 7
  %v445 = vsub.s32 0, %v444
  %v446 = vrot.slane %v441, %v445
  %v448 = vadd.f32 %v419, %v446
  %v449 = vadd.f32 %v422, %v446
  %v450 = vadd.f32 %v425, %v446
  %v451 = vadd.f32 %v428, %v446
  %v452 = vadd.f32 %v431, %v446
  %v453 = vadd.f32 %v434, %v446
  %v454 = vadd.f32 %v437, %v446
  %v455 = vadd.f32 %v440, %v446
  %v456 = vtanh.pop %v448
  %v457 = vtanh.pop %v449
  %v458 = vtanh.pop %v450
  %v459 = vtanh.pop %v451
  %v460 = vtanh.pop %v452
  %v461 = vtanh.pop %v453
  %v462 = vtanh.pop %v454
  %v463 = vtanh.pop %v455
  %vm464 = vcmask 1024
  %v465 = vsel %vm464, %v456, -inf
  %v466 = vsel %vm464, %v457, -inf
  %v467 = vsel %vm464, %v458, -inf
  %v468 = vsel %vm464, %v459, -inf
  %v469 = vsel %vm464, %v460, -inf
  %v470 = vmax.f32 %v465, %v469
  %v471 = vsel %vm464, %v461, -inf
  %v472 = vmax.f32 %v466, %v471
  %v473 = vsel %vm464, %v462, -inf
  %v474 = vmax.f32 %v467, %v473
  %v475 = vsel %vm464, %v463, -inf
  %v476 = vmax.f32 %v468, %v475
  %v477 = vmax.f32 %v470, %v472
  %v478 = vmax.f32 %v474, %v476
  %v479 = vmax.f32 %v477, %v478
  %v480 = vsub.f32 %v456, %v479
  %v481 = vsub.f32 %v457, %v479
  %v482 = vsub.f32 %v458, %v479
  %v483 = vsub.f32 %v459, %v479
  %v484 = vsub.f32 %v460, %v479
  %v485 = vsub.f32 %v461, %v479
  %v486 = vsub.f32 %v462, %v479
  %v487 = vsub.f32 %v463, %v479
  %v488 = vmul.f32 %v480, 1.442695
  %v489 = vpow.pop %v488
  %v490 = vmul.f32 %v481, 1.442695
  %v491 = vpow.pop %v490
  %v492 = vmul.f32 %v482, 1.442695
  %v493 = vpow.pop %v492
  %v494 = vmul.f32 %v483, 1.442695
  %v495 = vpow.pop %v494
  %v496 = vmul.f32 %v484, 1.442695
  %v497 = vpow.pop %v496
  %v498 = vmul.f32 %v485, 1.442695
  %v499 = vpow.pop %v498
  %v500 = vmul.f32 %v486, 1.442695
  %v501 = vpow.pop %v500
  %v502 = vmul.f32 %v487, 1.442695
  %v503 = vpow.pop %v502
  %v504 = vsel %vm464, %v489, 0.0
  %v505 = vsel %vm464, %v491, 0.0
  %v506 = vadd.f32 %v504, %v505
  %v507 = vsel %vm464, %v493, 0.0
  %v508 = vadd.f32 %v506, %v507
  %v509 = vsel %vm464, %v495, 0.0
  %v510 = vadd.f32 %v508, %v509
  %v511 = vsel %vm464, %v497, 0.0
  %v512 = vadd.f32 %v510, %v511
  %v513 = vsel %vm464, %v499, 0.0
  %v514 = vadd.f32 %v512, %v513
  %v515 = vsel %vm464, %v501, 0.0
  %v516 = vadd.f32 %v514, %v515
  %v517 = vsel %vm464, %v503, 0.0
  %v518 = vadd.f32 %v516, %v517
  %v519 = vrcp.pop %v518
  %v520 = vmul.f32 %v489, %v519
  %v521 = vmul.f32 %v491, %v519
  %v522 = vmul.f32 %v493, %v519
  %v523 = vmul.f32 %v495, %v519
  %v524 = vmul.f32 %v497, %v519
  %v525 = vmul.f32 %v499, %v519
  %v526 = vmul.f32 %v501, %v519
  %v527 = vmul.f32 %v503, %v519
  %v528 = vld [vmem:[%s7] sm:$0x3]
  %v529 = vld [vmem:[%s7 + $0x2] sm:$0x3]
  %v530 = vld [vmem:[%s7 + $0x4] sm:$0x3]
  %v531 = vld [vmem:[%s7 + $0x6] sm:$0x3]
  %v532 = vld [vmem:[%s7 + $0x8] sm:$0x3]
  %v533 = vld [vmem:[%s7 + $0xa] sm:$0x3]
  %v534 = vld [vmem:[%s7 + $0xc] sm:$0x3]
  %v535 = vld [vmem:[%s7 + $0xe] sm:$0x3]
  %v536 = vmul.f32 %v520, %v528
  %v537 = vmul.f32 %v521, %v529
  %v538 = vmul.f32 %v522, %v530
  %v539 = vmul.f32 %v523, %v531
  %v540 = vmul.f32 %v524, %v532
  %v541 = vmul.f32 %v525, %v533
  %v542 = vmul.f32 %v526, %v534
  %v543 = vmul.f32 %v527, %v535
  %v544 = vsel %vm464, %v536, 0.0
  %v545 = vsel %vm464, %v537, 0.0
  %v546 = vadd.f32 %v544, %v545
  %v547 = vsel %vm464, %v538, 0.0
  %v548 = vadd.f32 %v546, %v547
  %v549 = vsel %vm464, %v539, 0.0
  %v550 = vadd.f32 %v548, %v549
  %v551 = vsel %vm464, %v540, 0.0
  %v552 = vadd.f32 %v550, %v551
  %v553 = vsel %vm464, %v541, 0.0
  %v554 = vadd.f32 %v552, %v553
  %v555 = vsel %vm464, %v542, 0.0
  %v556 = vadd.f32 %v554, %v555
  %v557 = vsel %vm464, %v543, 0.0
  %v558 = vadd.f32 %v556, %v557
  %v559 = vmax.f32 %v558, 1e-30
  %v560 = vrcp.pop %v559
  %v561 = vmul.f32 %v536, %v560
  %v562 = vmul.f32 %v537, %v560
  %v563 = vmul.f32 %v538, %v560
  %v564 = vmul.f32 %v539, %v560
  %v565 = vmul.f32 %v540, %v560
  %v566 = vmul.f32 %v541, %v560
  %v567 = vmul.f32 %v542, %v560
  %v568 = vmul.f32 %v543, %v560
  %569 = vst.msk [vmem:[%s9] sm:$0x3] %vm464, %v561
  %570 = vst.msk [vmem:[%s9 + $0x2] sm:$0x3] %vm464, %v562
  %571 = vst.msk [vmem:[%s9 + $0x4] sm:$0x3] %vm464, %v563
  %572 = vst.msk [vmem:[%s9 + $0x6] sm:$0x3] %vm464, %v564
  %573 = vst.msk [vmem:[%s9 + $0x8] sm:$0x3] %vm464, %v565
  %574 = vst.msk [vmem:[%s9 + $0xa] sm:$0x3] %vm464, %v566
  %575 = vst.msk [vmem:[%s9 + $0xc] sm:$0x3] %vm464, %v567
  %576 = vst.msk [vmem:[%s9 + $0xe] sm:$0x3] %vm464, %v568
  %578 = vset.pattern.permute.xlu0 0
  %579 = vperm.xlu0 %578, %v561
  %v580 = vpop.permute.xlu0 %579
  %583 = vset.pattern.permute.xlu0 0
  %584 = vperm.xlu0 %583, %v562
  %v585 = vpop.permute.xlu0 %584
  %588 = vset.pattern.permute.xlu0 0
  %589 = vperm.xlu0 %588, %v563
  %v590 = vpop.permute.xlu0 %589
  %593 = vset.pattern.permute.xlu0 0
  %594 = vperm.xlu0 %593, %v564
  %v595 = vpop.permute.xlu0 %594
  %598 = vset.pattern.permute.xlu0 0
  %599 = vperm.xlu0 %598, %v565
  %v600 = vpop.permute.xlu0 %599
  %603 = vset.pattern.permute.xlu0 0
  %604 = vperm.xlu0 %603, %v566
  %v605 = vpop.permute.xlu0 %604
  %608 = vset.pattern.permute.xlu0 0
  %609 = vperm.xlu0 %608, %v567
  %v610 = vpop.permute.xlu0 %609
  %613 = vset.pattern.permute.xlu0 0
  %614 = vperm.xlu0 %613, %v568
  %v615 = vpop.permute.xlu0 %614
  %v617 = vmul.f32 %v393, %v580
  %v618 = vmul.f32 %v394, %v585
  %v619 = vmul.f32 %v395, %v590
  %v620 = vmul.f32 %v396, %v595
  %v621 = vmul.f32 %v397, %v600
  %v622 = vmul.f32 %v398, %v605
  %v623 = vmul.f32 %v399, %v610
  %v624 = vmul.f32 %v400, %v615
  %v625 = vsel %vm416, %v617, 0.0
  %v626 = vsel %vm416, %v618, 0.0
  %v627 = vadd.f32 %v625, %v626
  %v628 = vsel %vm416, %v619, 0.0
  %v629 = vadd.f32 %v627, %v628
  %v630 = vsel %vm416, %v620, 0.0
  %v631 = vadd.f32 %v629, %v630
  %v632 = vsel %vm416, %v621, 0.0
  %v633 = vadd.f32 %v631, %v632
  %v634 = vsel %vm416, %v622, 0.0
  %v635 = vadd.f32 %v633, %v634
  %v636 = vsel %vm416, %v623, 0.0
  %v637 = vadd.f32 %v635, %v636
  %v638 = vsel %vm416, %v624, 0.0
  %v639 = vadd.f32 %v637, %v638
  %v640 = vld [vmem:[%s4] sm:$0xff]
  %v641 = vld [vmem:[%s4 + $0x8] sm:$0xff]
  %v642 = vld [vmem:[%s4 + $0x10] sm:$0xff]
  %v643 = vld [vmem:[%s4 + $0x18] sm:$0xff]
  %v644 = vld [vmem:[%s4 + $0x20] sm:$0xff]
  %v645 = vld [vmem:[%s4 + $0x28] sm:$0xff]
  %v646 = vld [vmem:[%s4 + $0x30] sm:$0xff]
  %v647 = vld [vmem:[%s4 + $0x38] sm:$0xff]
  %v648 = vld [vmem:[%s4 + $0x40] sm:$0xff]
  %v649 = vld [vmem:[%s4 + $0x48] sm:$0xff]
  %v650 = vld [vmem:[%s4 + $0x50] sm:$0xff]
  %v651 = vld [vmem:[%s4 + $0x58] sm:$0xff]
  %v652 = vld [vmem:[%s4 + $0x60] sm:$0xff]
  %v653 = vld [vmem:[%s4 + $0x68] sm:$0xff]
  %v654 = vld [vmem:[%s4 + $0x70] sm:$0xff]
  %v655 = vld [vmem:[%s4 + $0x78] sm:$0xff]
  %v656 = vld [vmem:[%s5] sm:$0x1]
  %v658 = vlaneseq
  %v659 = vshrl.u32 %v658, 7
  %v660 = vsub.s32 0, %v659
  %v661 = vrot.slane %v656, %v660
  %663 = vmatprep.subr.mxu0 0.0
  %664 = vmatpush1.msra.mxu0 %v640
  %665 = vmatprep.subr.mxu0 0.0
  %666 = vmatpush1.msra.mxu0 %v641
  %667 = vmatprep.subr.mxu0 0.0
  %668 = vmatpush1.msra.mxu0 %v642
  %669 = vmatprep.subr.mxu0 0.0
  %670 = vmatpush1.msra.mxu0 %v643
  %671 = vmatprep.subr.mxu0 0.0
  %672 = vmatpush1.msra.mxu0 %v644
  %673 = vmatprep.subr.mxu0 0.0
  %674 = vmatpush1.msra.mxu0 %v645
  %675 = vmatprep.subr.mxu0 0.0
  %676 = vmatpush1.msra.mxu0 %v646
  %677 = vmatprep.subr.mxu0 0.0
  %678 = vmatpush1.msra.mxu0 %v647
  %679 = vmatprep.subr.mxu0 0.0
  %680 = vmatpush1.msra.mxu0 %v648
  %681 = vmatprep.subr.mxu0 0.0
  %682 = vmatpush1.msra.mxu0 %v649
  %683 = vmatprep.subr.mxu0 0.0
  %684 = vmatpush1.msra.mxu0 %v650
  %685 = vmatprep.subr.mxu0 0.0
  %686 = vmatpush1.msra.mxu0 %v651
  %687 = vmatprep.subr.mxu0 0.0
  %688 = vmatpush1.msra.mxu0 %v652
  %689 = vmatprep.subr.mxu0 0.0
  %690 = vmatpush1.msra.mxu0 %v653
  %691 = vmatprep.subr.mxu0 0.0
  %692 = vmatpush1.msra.mxu0 %v654
  %693 = vmatprep.subr.mxu0 0.0
  %694 = vmatpush1.msra.mxu0 %v655
  %695 = vmatprep.subr.mxu0 0.0
  %696 = vmatpush1.msra.mxu0 0.0
  %697 = vmatprep.subr.mxu0 0.0
  %698 = vmatpush1.msra.mxu0 0.0
  %699 = vmatprep.subr.mxu0 0.0
  %700 = vmatpush1.msra.mxu0 0.0
  %701 = vmatprep.subr.mxu0 0.0
  %702 = vmatpush1.msra.mxu0 0.0
  %703 = vmatprep.subr.mxu0 0.0
  %704 = vmatpush1.msra.mxu0 0.0
  %705 = vmatprep.subr.mxu0 0.0
  %706 = vmatpush1.msra.mxu0 0.0
  %707 = vmatprep.subr.mxu0 0.0
  %708 = vmatpush1.msra.mxu0 0.0
  %709 = vmatprep.subr.mxu0 0.0
  %710 = vmatpush1.msra.mxu0 0.0
  %711 = vmatprep.subr.mxu0 0.0
  %712 = vmatpush1.msra.mxu0 0.0
  %713 = vmatprep.subr.mxu0 0.0
  %714 = vmatpush1.msra.mxu0 0.0
  %715 = vmatprep.subr.mxu0 0.0
  %716 = vmatpush1.msra.mxu0 0.0
  %717 = vmatprep.subr.mxu0 0.0
  %718 = vmatpush1.msra.mxu0 0.0
  %719 = vmatprep.subr.mxu0 0.0
  %720 = vmatpush1.msra.mxu0 0.0
  %721 = vmatprep.subr.mxu0 0.0
  %722 = vmatpush1.msra.mxu0 0.0
  %723 = vmatprep.subr.mxu0 0.0
  %724 = vmatpush1.msra.mxu0 0.0
  %725 = vmatprep.subr.mxu0 0.0
  %726 = vmatpush1.msra.mxu0 0.0
  %727 = vmatprep.mubr.f32.mxu0 0.0
  %728 = vmatmul.mubr.f32.gmra.mrb[0].mxu0 %v639
  %v729 = vpop.f32.mrb[0].mxu0
  %v730 = vadd.f32 %v661, %v729
  %v731 = vpop.f32.mrb[0].mxu0
  %732 = vdwg.mxu0
  %733 = vst [vmem:[%s8] sm:$0x3] %v730
  // Predicated region
  $region41: #{classifier_forward.1} parent=0 // pred_check
    _
  $region42: #{classifier_forward.1} parent=0 // pred_check_branch
    %735 = sbr.rel (0) target = $region44
  $region43: #{classifier_forward.1} parent=0 // pred_region
    _
  $region44: #{classifier_forward.1} parent=0 // pred_fallthru
    _
  // Predicated region
  $region45: #{classifier_forward.1} parent=0 // pred_check
    _
  $region46: #{classifier_forward.1} parent=0 // pred_check_branch
    %737 = sbr.rel (0) target = $region48
  $region47: #{classifier_forward.1} parent=0 // pred_region
    _
  $region48: #{classifier_forward.1} parent=0 // pred_fallthru
    _
  // Predicated region
  $region49: #{classifier_forward.1} parent=0 // pred_check
    _
  $region50: #{classifier_forward.1} parent=0 // pred_check_branch
    %739 = sbr.rel (0) target = $region52
  $region51: #{classifier_forward.1} parent=0 // pred_region
    _
  $region52: #{classifier_forward.1} parent=0 // pred_fallthru
    _
  // Predicated region
  $region53: #{classifier_forward.1} parent=0 // pred_check
    _
  $region54: #{classifier_forward.1} parent=0 // pred_check_branch
    %741 = sbr.rel (0) target = $region56
  $region55: #{classifier_forward.1} parent=0 // pred_region
    _
  $region56: #{classifier_forward.1} parent=0 // pred_fallthru
    _

</llo_original>
